<compile_context>
chip_gen: v5e
topology: v5e:2x2
jax: 0.10.0
libtpu: 0.0.40
codegen_flags: <defaults>
</compile_context>

<pallas_src>
import functools

import numpy as np
import jax
import jax.numpy as jnp
from jax.experimental import pallas as pl
from jax.experimental.pallas import tpu as pltpu


def _round_up(x, m):
    return ((x + m - 1) // m) * m


# ---------------------------------------------------------------------------
# Pallas kernel: one row-block of anchors against all columns.
# ---------------------------------------------------------------------------
def _ms_loss_kernel(n_ref, z_ref, lab_col_ref, lab_row_ref,
                    loss_ref, pos_cnt_ref, neg_cnt_ref,
                    *, block_rows, alpha, beta, base, mine_eps):
    i = pl.program_id(0)
    n_valid = n_ref[0]                       # real (unpadded) batch size, SMEM scalar

    tr = block_rows
    n_pad = z_ref.shape[0]

    # Row block is a slice of the resident full operand (no duplicate HBM fetch).
    row_start = pl.multiple_of(i * tr, tr)
    z_block = z_ref[pl.ds(row_start, tr), :]          # (tr, D), input dtype
    z_all = z_ref[...]                                # (n_pad, D), input dtype

    # Similarity strip on the MXU: contract feature dims of both operands
    # (A @ B^T pattern, no explicit transpose materialized).
    sim = jax.lax.dot_general(
        z_block, z_all, (((1,), (1,)), ((), ())),
        preferred_element_type=jnp.float32,
    )                                                 # (tr, n_pad) f32

    lab_r = lab_col_ref[...]                          # (tr, 1) int32
    lab_c = lab_row_ref[...]                          # (1, n_pad) int32
    same_label = lab_r == lab_c                       # (tr, n_pad)

    col_ids = jax.lax.broadcasted_iota(jnp.int32, (tr, n_pad), 1)
    local_rows = jax.lax.broadcasted_iota(jnp.int32, (tr, n_pad), 0)
    col_valid = col_ids < n_valid
    off_diag = col_ids != (local_rows + row_start)

    pos_mask = jnp.logical_and(jnp.logical_and(same_label, off_diag), col_valid)
    neg_mask = jnp.logical_and(jnp.logical_not(same_label), col_valid)

    big = jnp.float32(1e30)
    # MultiSimilarityMiner row statistics.
    max_neg = jnp.max(jnp.where(neg_mask, sim, -big), axis=-1, keepdims=True)  # (tr,1)
    min_pos = jnp.min(jnp.where(pos_mask, sim, big), axis=-1, keepdims=True)   # (tr,1)

    keep_pos = jnp.logical_and(pos_mask, (sim - mine_eps) < max_neg)
    keep_neg = jnp.logical_and(neg_mask, (sim + mine_eps) > min_pos)

    # Counts are reused as the "any kept" predicate (saves two row reductions).
    pos_cnt = jnp.sum(keep_pos.astype(jnp.float32), axis=-1, keepdims=True)    # (tr,1)
    neg_cnt = jnp.sum(keep_neg.astype(jnp.float32), axis=-1, keepdims=True)    # (tr,1)

    def masked_lse_add_one(arg, mask, any_kept):
        # PML lmu.logsumexp(arg, keep_mask=mask, add_one=True): log(1 + sum exp(arg)),
        # stabilized, 0 where nothing is kept.
        masked = jnp.where(mask, arg, -big)
        m = jnp.maximum(jnp.max(masked, axis=-1, keepdims=True), 0.0)
        s = jnp.sum(jnp.where(mask, jnp.exp(arg - m), 0.0), axis=-1, keepdims=True)
        lse = m + jnp.log(s + jnp.exp(-m))
        return jnp.where(any_kept, lse, 0.0)

    pos_term = (1.0 / alpha) * masked_lse_add_one(
        alpha * (base - sim), keep_pos, pos_cnt > 0.0)
    neg_term = (1.0 / beta) * masked_lse_add_one(
        beta * (sim - base), keep_neg, neg_cnt > 0.0)

    loss_ref[...] = pos_term + neg_term               # (tr, 1)
    pos_cnt_ref[...] = pos_cnt
    neg_cnt_ref[...] = neg_cnt


# ---------------------------------------------------------------------------
# Jittable forward (mask-based: works with traced labels, static shapes only).
# ---------------------------------------------------------------------------
def _multi_similarity_loss(embeddings, labels, *, alpha, beta, base, mine_eps,
                           block_rows):
    n, d = embeddings.shape

    # CosineSimilarity: L2-normalize rows (torch.nn.functional.normalize, eps=1e-12).
    x = embeddings.astype(jnp.float32)
    norm = jnp.sqrt(jnp.sum(x * x, axis=-1, keepdims=True))
    z = (x / jnp.maximum(norm, 1e-12)).astype(embeddings.dtype)  # keep bf16 on MXU

    # Row-block / padding geometry (static). Clamp the row tile so strip-sized f32
    # temporaries (~10 live at once) stay inside a fixed VMEM budget.
    n_pad8 = _round_up(n, 8)
    strip_budget = 24 * 2**20
    max_tr = max(8, ((strip_budget // (10 * 4 * n_pad8)) // 8) * 8)
    tr = _round_up(min(block_rows, n_pad8, max_tr), 8)
    n_pad = _round_up(n, tr)

    if n_pad != n:
        z = jnp.pad(z, ((0, n_pad - n), (0, 0)))
        labels_p = jnp.pad(labels.astype(jnp.int32), (0, n_pad - n),
                           constant_values=-1)
    else:
        labels_p = labels.astype(jnp.int32)

    lab_col = labels_p.reshape(n_pad, 1)
    lab_row = labels_p.reshape(1, n_pad)
    n_arr = jnp.asarray([n], dtype=jnp.int32)

    grid = (n_pad // tr,)

    # Explicit scoped-VMEM budget for the chosen tiles: resident z (worst case
    # double-buffered) + (tr, n_pad) strip temporaries + label views + outputs.
    # TODO(synk): very large (N, D) would need column tiling of the resident operand;
    # typical metric-learning batches fit comfortably.
    est = (2 * n_pad * d * z.dtype.itemsize
           + 12 * tr * n_pad * 4
           + 4 * n_pad * 4
           + 10 * tr * 4)
    vmem_limit = int(min(56 * 2**20, max(8 * 2**20, est + (2 << 20))))

    kernel = functools.partial(
        _ms_loss_kernel, block_rows=tr,
        alpha=float(alpha), beta=float(beta), base=float(base),
        mine_eps=float(mine_eps))

    losses, pos_cnt, neg_cnt = pl.pallas_call(
        kernel,
        out_shape=(
            jax.ShapeDtypeStruct((n_pad, 1), jnp.float32),
            jax.ShapeDtypeStruct((n_pad, 1), jnp.float32),
            jax.ShapeDtypeStruct((n_pad, 1), jnp.float32),
        ),
        grid=grid,
        in_specs=[
            pl.BlockSpec(memory_space=pltpu.MemorySpace.SMEM),   # real batch size
            pl.BlockSpec((n_pad, d), lambda i: (0, 0)),          # z, resident in VMEM
            pl.BlockSpec((tr, 1), lambda i: (i, 0)),             # labels (column view)
            pl.BlockSpec((1, n_pad), lambda i: (0, 0)),          # labels (row view)
        ],
        out_specs=(
            pl.BlockSpec((tr, 1), lambda i: (i, 0)),
            pl.BlockSpec((tr, 1), lambda i: (i, 0)),
            pl.BlockSpec((tr, 1), lambda i: (i, 0)),
        ),
        compiler_params=pltpu.CompilerParams(
            dimension_semantics=("parallel",),                   # v7x: 2 TCs split rows
            vmem_limit_bytes=vmem_limit,
        ),
    )(n_arr, z, lab_col, lab_row)

    row_valid = (jnp.arange(n_pad, dtype=jnp.int32) < n).reshape(n_pad, 1)
    per_anchor = jnp.where(row_valid, losses, 0.0)
    pos_total = jnp.sum(jnp.where(row_valid, pos_cnt, 0.0))
    neg_total = jnp.sum(jnp.where(row_valid, neg_cnt, 0.0))
    mean_loss = jnp.sum(per_anchor) / jnp.float32(n)   # PML MeanReducer over all anchors

    # PML GenericPairLoss: zero loss if the mined tuple has <=1 pos AND <=1 neg pairs.
    return jnp.where(jnp.logical_and(pos_total <= 1.0, neg_total <= 1.0),
                     jnp.float32(0.0), mean_loss)


# ---------------------------------------------------------------------------
# Module wrapper mirroring the PyTorch MultiSimilarityLoss forward.
# ---------------------------------------------------------------------------
class MultiSimilarityLoss:
    def __init__(self, thresh=0.5, epsilon=0.1, scale_pos=2.0, scale_neg=50.0,
                 block_rows=128):
        self.thresh = float(thresh)
        self.epsilon = float(epsilon)
        self.scale_pos = float(scale_pos)
        self.scale_neg = float(scale_neg)
        # TODO(synk): PML's default MeanReducer / default CosineSimilarity are assumed
        # (matches the spec, which passes no custom reducer or distance).
        self._fn = jax.jit(functools.partial(
            _multi_similarity_loss,
            alpha=self.scale_pos, beta=self.scale_neg, base=self.thresh,
            mine_eps=self.epsilon, block_rows=int(block_rows)))

    def __call__(self, embeddings, labels):
        return self._fn(embeddings, labels)


# ---------------------------------------------------------------------------
# Pure numpy (float64) reference replicating PML miner + loss, for verification.
# ---------------------------------------------------------------------------
def _reference_ms_loss(embeddings, labels, *, thresh, epsilon, scale_pos, scale_neg):
    x = np.asarray(embeddings, dtype=np.float64)
    labels = np.asarray(labels)
    n = x.shape[0]
    z = x / np.maximum(np.linalg.norm(x, axis=1, keepdims=True), 1e-12)
    sim = z @ z.T
    same = labels[:, None] == labels[None, :]
    eye = np.eye(n, dtype=bool)
    pos_mask = same & ~eye
    neg_mask = ~same

    max_neg = np.where(neg_mask, sim, -np.inf).max(axis=1, keepdims=True)
    min_pos = np.where(pos_mask, sim, np.inf).min(axis=1, keepdims=True)
    keep_pos = pos_mask & ((sim - epsilon) < max_neg)
    keep_neg = neg_mask & ((sim + epsilon) > min_pos)

    if keep_pos.sum() <= 1 and keep_neg.sum() <= 1:
        return 0.0

    def lse_add_one(arg, mask):
        out = np.zeros(n)
        for i in range(n):
            vals = arg[i][mask[i]]
            if vals.size:
                out[i] = np.log1p(np.exp(vals).sum())
        return out

    pos_term = (1.0 / scale_pos) * lse_add_one(scale_pos * (thresh - sim), keep_pos)
    neg_term = (1.0 / scale_neg) * lse_add_one(scale_neg * (sim - thresh), keep_neg)
    return float((pos_term + neg_term).mean())


if __name__ == "__main__":
    key = jax.random.PRNGKey(0)
    n, d = 96, 64                                   # 96 samples, 64-dim embeddings
    embeddings = jax.random.normal(key, (n, d), dtype=jnp.float32)
    labels = jnp.arange(n, dtype=jnp.int32) % 12    # 12 classes x 8 samples

    loss_mod = MultiSimilarityLoss(block_rows=32)   # 3 row blocks -> exercises the grid
    loss = loss_mod(embeddings, labels)
    loss = jax.block_until_ready(loss)

    ref = _reference_ms_loss(np.asarray(embeddings), np.asarray(labels),
                             thresh=0.5, epsilon=0.1, scale_pos=2.0, scale_neg=50.0)
    np.testing.assert_allclose(float(loss), ref, rtol=1e-3, atol=1e-3)
    print("KERNEL_OK")
</pallas_src>

<mosaic_0001>
module attributes {stable_mosaic.version = 11 : i64} {
  func.func @_ms_loss_kernel(%arg0: i32, %arg1: memref<1xi32, #tpu.memory_space<smem>>, %arg2: memref<96x64xf32, #tpu.memory_space<vmem>>, %arg3: memref<32x1xi32, #tpu.memory_space<vmem>>, %arg4: memref<1x96xi32, #tpu.memory_space<vmem>>, %arg5: memref<32x1xf32, #tpu.memory_space<vmem>>, %arg6: memref<32x1xf32, #tpu.memory_space<vmem>>, %arg7: memref<32x1xf32, #tpu.memory_space<vmem>>) attributes {dimension_semantics = [#tpu.dimension_semantics<parallel>], iteration_bounds = array<i64: 3>, scalar_prefetch = 0 : i64, scratch_operands = 0 : i64, tpu.core_type = #tpu.core_type<tc>, window_params = [{transform_indices = @transform_0, window_bounds = array<i64: 1>}, {pipeline_mode = #tpu.pipeline_mode<synchronous>, transform_indices = @transform_1, window_bounds = array<i64: 96, 64>}, {transform_indices = @transform_2, window_bounds = array<i64: 32, 1>}, {pipeline_mode = #tpu.pipeline_mode<synchronous>, transform_indices = @transform_3, window_bounds = array<i64: 1, 96>}, {transform_indices = @transform_4, window_bounds = array<i64: 32, 1>}, {transform_indices = @transform_5, window_bounds = array<i64: 32, 1>}, {transform_indices = @transform_6, window_bounds = array<i64: 32, 1>}]} {
    %c0 = arith.constant 0 : index
    %0 = memref.load %arg1[%c0] : memref<1xi32, #tpu.memory_space<smem>>
    %c32_i32 = arith.constant 32 : i32
    %1 = arith.muli %arg0, %c32_i32 : i32
    %2 = tpu.assume_multiple %1, 32 : i32
    %3 = arith.index_cast %2 : i32 to index
    %c0_0 = arith.constant 0 : index
    %4 = vector.load %arg2[%3, %c0_0] : memref<96x64xf32, #tpu.memory_space<vmem>>, vector<32x64xf32>
    %c0_1 = arith.constant 0 : index
    %c0_2 = arith.constant 0 : index
    %5 = vector.load %arg2[%c0_1, %c0_2] : memref<96x64xf32, #tpu.memory_space<vmem>>, vector<96x64xf32>
    %cst = arith.constant dense<0.000000e+00> : vector<32x96xf32>
    %6 = tpu.matmul %4, %5, %cst {dimension_numbers = #tpu.dot_dimension_numbers<[1], [1], [0], [0], [0, 0, 1, 0], [], []>} : vector<32x64xf32>, vector<96x64xf32>, vector<32x96xf32> -> vector<32x96xf32>
    %c0_3 = arith.constant 0 : index
    %c0_4 = arith.constant 0 : index
    %7 = vector.load %arg3[%c0_3, %c0_4] : memref<32x1xi32, #tpu.memory_space<vmem>>, vector<32x1xi32>
    %c0_5 = arith.constant 0 : index
    %c0_6 = arith.constant 0 : index
    %8 = vector.load %arg4[%c0_5, %c0_6] : memref<1x96xi32, #tpu.memory_space<vmem>>, vector<1x96xi32>
    %9 = vector.broadcast %7 : vector<32x1xi32> to vector<32x96xi32>
    %10 = vector.broadcast %8 : vector<1x96xi32> to vector<32x96xi32>
    %11 = arith.cmpi eq, %9, %10 : vector<32x96xi32>
    %12 = tpu.iota {dimensions = array<i32: 1>} : vector<32x96xi32>
    %13 = tpu.iota {dimensions = array<i32: 0>} : vector<32x96xi32>
    %14 = vector.broadcast %0 : i32 to vector<32x96xi32>
    %15 = arith.cmpi slt, %12, %14 : vector<32x96xi32>
    %16 = vector.broadcast %2 : i32 to vector<32x96xi32>
    %17 = arith.addi %13, %16 : vector<32x96xi32>
    %18 = arith.cmpi ne, %12, %17 : vector<32x96xi32>
    %19 = arith.andi %11, %18 : vector<32x96xi1>
    %20 = arith.andi %19, %15 : vector<32x96xi1>
    %cst_7 = arith.constant dense<true> : vector<32x96xi1>
    %21 = arith.xori %11, %cst_7 : vector<32x96xi1>
    %22 = arith.andi %21, %15 : vector<32x96xi1>
    %cst_8 = arith.constant 0.000000e+00 : f32
    %cst_9 = arith.constant 1.000000e+30 : f32
    %23 = arith.subf %cst_8, %cst_9 : f32
    %24 = vector.broadcast %23 : f32 to vector<32x96xf32>
    %25 = arith.select %22, %6, %24 : vector<32x96xi1>, vector<32x96xf32>
    %cst_10 = arith.constant dense<0xFF800000> : vector<32xf32>
    %26 = vector.multi_reduction <maximumf>, %25, %cst_10 [1] : vector<32x96xf32> to vector<32xf32>
    %27 = vector.shape_cast %26 : vector<32xf32> to vector<32x1xf32>
    %cst_11 = arith.constant 1.000000e+30 : f32
    %28 = vector.broadcast %cst_11 : f32 to vector<32x96xf32>
    %29 = arith.select %20, %6, %28 : vector<32x96xi1>, vector<32x96xf32>
    %cst_12 = arith.constant dense<0x7F800000> : vector<32xf32>
    %30 = vector.multi_reduction <minimumf>, %29, %cst_12 [1] : vector<32x96xf32> to vector<32xf32>
    %31 = vector.shape_cast %30 : vector<32xf32> to vector<32x1xf32>
    %cst_13 = arith.constant 1.000000e-01 : f32
    %32 = vector.broadcast %cst_13 : f32 to vector<32x96xf32>
    %33 = arith.subf %6, %32 : vector<32x96xf32>
    %34 = vector.broadcast %27 : vector<32x1xf32> to vector<32x96xf32>
    %35 = arith.cmpf olt, %33, %34 : vector<32x96xf32>
    %36 = arith.andi %20, %35 : vector<32x96xi1>
    %cst_14 = arith.constant 1.000000e-01 : f32
    %37 = vector.broadcast %cst_14 : f32 to vector<32x96xf32>
    %38 = arith.addf %6, %37 : vector<32x96xf32>
    %39 = vector.broadcast %31 : vector<32x1xf32> to vector<32x96xf32>
    %40 = arith.cmpf ogt, %38, %39 : vector<32x96xf32>
    %41 = arith.andi %22, %40 : vector<32x96xi1>
    %42 = arith.extui %36 : vector<32x96xi1> to vector<32x96xi32>
    %43 = arith.sitofp %42 : vector<32x96xi32> to vector<32x96xf32>
    %cst_15 = arith.constant dense<0.000000e+00> : vector<32xf32>
    %44 = vector.multi_reduction <add>, %43, %cst_15 [1] : vector<32x96xf32> to vector<32xf32>
    %45 = vector.shape_cast %44 : vector<32xf32> to vector<32x1xf32>
    %46 = arith.extui %41 : vector<32x96xi1> to vector<32x96xi32>
    %47 = arith.sitofp %46 : vector<32x96xi32> to vector<32x96xf32>
    %cst_16 = arith.constant dense<0.000000e+00> : vector<32xf32>
    %48 = vector.multi_reduction <add>, %47, %cst_16 [1] : vector<32x96xf32> to vector<32xf32>
    %49 = vector.shape_cast %48 : vector<32xf32> to vector<32x1xf32>
    %cst_17 = arith.constant 5.000000e-01 : f32
    %50 = vector.broadcast %cst_17 : f32 to vector<32x96xf32>
    %51 = arith.subf %50, %6 : vector<32x96xf32>
    %cst_18 = arith.constant 2.000000e+00 : f32
    %52 = vector.broadcast %cst_18 : f32 to vector<32x96xf32>
    %53 = arith.mulf %52, %51 : vector<32x96xf32>
    %cst_19 = arith.constant 0.000000e+00 : f32
    %54 = vector.broadcast %cst_19 : f32 to vector<32x1xf32>
    %55 = arith.cmpf ogt, %45, %54 : vector<32x1xf32>
    %cst_20 = arith.constant 0.000000e+00 : f32
    %cst_21 = arith.constant 1.000000e+30 : f32
    %56 = arith.subf %cst_20, %cst_21 : f32
    %57 = vector.broadcast %56 : f32 to vector<32x96xf32>
    %58 = arith.select %36, %53, %57 : vector<32x96xi1>, vector<32x96xf32>
    %cst_22 = arith.constant dense<0xFF800000> : vector<32xf32>
    %59 = vector.multi_reduction <maximumf>, %58, %cst_22 [1] : vector<32x96xf32> to vector<32xf32>
    %60 = vector.shape_cast %59 : vector<32xf32> to vector<32x1xf32>
    %cst_23 = arith.constant 0.000000e+00 : f32
    %61 = vector.broadcast %cst_23 : f32 to vector<32x1xf32>
    %62 = arith.maximumf %60, %61 : vector<32x1xf32>
    %63 = vector.broadcast %62 : vector<32x1xf32> to vector<32x96xf32>
    %64 = arith.subf %53, %63 : vector<32x96xf32>
    %65 = math.exp %64 : vector<32x96xf32>
    %cst_24 = arith.constant 0.000000e+00 : f32
    %66 = vector.broadcast %cst_24 : f32 to vector<32x96xf32>
    %67 = arith.select %36, %65, %66 : vector<32x96xi1>, vector<32x96xf32>
    %cst_25 = arith.constant dense<0.000000e+00> : vector<32xf32>
    %68 = vector.multi_reduction <add>, %67, %cst_25 [1] : vector<32x96xf32> to vector<32xf32>
    %69 = vector.shape_cast %68 : vector<32xf32> to vector<32x1xf32>
    %cst_26 = arith.constant 0.000000e+00 : f32
    %70 = vector.broadcast %cst_26 : f32 to vector<32x1xf32>
    %71 = arith.subf %70, %62 : vector<32x1xf32>
    %72 = math.exp %71 : vector<32x1xf32>
    %73 = arith.addf %69, %72 : vector<32x1xf32>
    %74 = math.log %73 : vector<32x1xf32>
    %75 = arith.addf %62, %74 : vector<32x1xf32>
    %cst_27 = arith.constant 0.000000e+00 : f32
    %76 = vector.broadcast %cst_27 : f32 to vector<32x1xf32>
    %77 = arith.select %55, %75, %76 : vector<32x1xi1>, vector<32x1xf32>
    %cst_28 = arith.constant 5.000000e-01 : f32
    %78 = vector.broadcast %cst_28 : f32 to vector<32x1xf32>
    %79 = arith.mulf %78, %77 : vector<32x1xf32>
    %cst_29 = arith.constant 5.000000e-01 : f32
    %80 = vector.broadcast %cst_29 : f32 to vector<32x96xf32>
    %81 = arith.subf %6, %80 : vector<32x96xf32>
    %cst_30 = arith.constant 5.000000e+01 : f32
    %82 = vector.broadcast %cst_30 : f32 to vector<32x96xf32>
    %83 = arith.mulf %82, %81 : vector<32x96xf32>
    %cst_31 = arith.constant 0.000000e+00 : f32
    %84 = vector.broadcast %cst_31 : f32 to vector<32x1xf32>
    %85 = arith.cmpf ogt, %49, %84 : vector<32x1xf32>
    %cst_32 = arith.constant 0.000000e+00 : f32
    %cst_33 = arith.constant 1.000000e+30 : f32
    %86 = arith.subf %cst_32, %cst_33 : f32
    %87 = vector.broadcast %86 : f32 to vector<32x96xf32>
    %88 = arith.select %41, %83, %87 : vector<32x96xi1>, vector<32x96xf32>
    %cst_34 = arith.constant dense<0xFF800000> : vector<32xf32>
    %89 = vector.multi_reduction <maximumf>, %88, %cst_34 [1] : vector<32x96xf32> to vector<32xf32>
    %90 = vector.shape_cast %89 : vector<32xf32> to vector<32x1xf32>
    %cst_35 = arith.constant 0.000000e+00 : f32
    %91 = vector.broadcast %cst_35 : f32 to vector<32x1xf32>
    %92 = arith.maximumf %90, %91 : vector<32x1xf32>
    %93 = vector.broadcast %92 : vector<32x1xf32> to vector<32x96xf32>
    %94 = arith.subf %83, %93 : vector<32x96xf32>
    %95 = math.exp %94 : vector<32x96xf32>
    %cst_36 = arith.constant 0.000000e+00 : f32
    %96 = vector.broadcast %cst_36 : f32 to vector<32x96xf32>
    %97 = arith.select %41, %95, %96 : vector<32x96xi1>, vector<32x96xf32>
    %cst_37 = arith.constant dense<0.000000e+00> : vector<32xf32>
    %98 = vector.multi_reduction <add>, %97, %cst_37 [1] : vector<32x96xf32> to vector<32xf32>
    %99 = vector.shape_cast %98 : vector<32xf32> to vector<32x1xf32>
    %cst_38 = arith.constant 0.000000e+00 : f32
    %100 = vector.broadcast %cst_38 : f32 to vector<32x1xf32>
    %101 = arith.subf %100, %92 : vector<32x1xf32>
    %102 = math.exp %101 : vector<32x1xf32>
    %103 = arith.addf %99, %102 : vector<32x1xf32>
    %104 = math.log %103 : vector<32x1xf32>
    %105 = arith.addf %92, %104 : vector<32x1xf32>
    %cst_39 = arith.constant 0.000000e+00 : f32
    %106 = vector.broadcast %cst_39 : f32 to vector<32x1xf32>
    %107 = arith.select %85, %105, %106 : vector<32x1xi1>, vector<32x1xf32>
    %cst_40 = arith.constant 2.000000e-02 : f32
    %108 = vector.broadcast %cst_40 : f32 to vector<32x1xf32>
    %109 = arith.mulf %108, %107 : vector<32x1xf32>
    %110 = arith.addf %79, %109 : vector<32x1xf32>
    %c0_41 = arith.constant 0 : index
    %c0_42 = arith.constant 0 : index
    %111 = vector.load %arg5[%c0_41, %c0_42] : memref<32x1xf32, #tpu.memory_space<vmem>>, vector<32x1xf32>
    tpu.vector_store %arg5[%c0_41, %c0_42], %110 {strides = array<i32>} : memref<32x1xf32, #tpu.memory_space<vmem>>, vector<32x1xf32>,
    %c0_43 = arith.constant 0 : index
    %c0_44 = arith.constant 0 : index
    %112 = vector.load %arg6[%c0_43, %c0_44] : memref<32x1xf32, #tpu.memory_space<vmem>>, vector<32x1xf32>
    tpu.vector_store %arg6[%c0_43, %c0_44], %45 {strides = array<i32>} : memref<32x1xf32, #tpu.memory_space<vmem>>, vector<32x1xf32>,
    %c0_45 = arith.constant 0 : index
    %c0_46 = arith.constant 0 : index
    %113 = vector.load %arg7[%c0_45, %c0_46] : memref<32x1xf32, #tpu.memory_space<vmem>>, vector<32x1xf32>
    tpu.vector_store %arg7[%c0_45, %c0_46], %49 {strides = array<i32>} : memref<32x1xf32, #tpu.memory_space<vmem>>, vector<32x1xf32>,
    return
  }
  func.func @transform_0(%arg0: i32) -> i32 {
    %c0_i32 = arith.constant 0 : i32
    %c0_i32_0 = arith.constant 0 : i32
    return %c0_i32 : i32
  }
  func.func @transform_1(%arg0: i32) -> (i32, i32) {
    %c0_i32 = arith.constant 0 : i32
    %c0_i32_0 = arith.constant 0 : i32
    %c0_i32_1 = arith.constant 0 : i32
    return %c0_i32, %c0_i32_0 : i32, i32
  }
  func.func @transform_2(%arg0: i32) -> (i32, i32) {
    %c0_i32 = arith.constant 0 : i32
    %c0_i32_0 = arith.constant 0 : i32
    return %arg0, %c0_i32 : i32, i32
  }
  func.func @transform_3(%arg0: i32) -> (i32, i32) {
    %c0_i32 = arith.constant 0 : i32
    %c0_i32_0 = arith.constant 0 : i32
    %c0_i32_1 = arith.constant 0 : i32
    return %c0_i32, %c0_i32_0 : i32, i32
  }
  func.func @transform_4(%arg0: i32) -> (i32, i32) {
    %c0_i32 = arith.constant 0 : i32
    %c0_i32_0 = arith.constant 0 : i32
    return %arg0, %c0_i32 : i32, i32
  }
  func.func @transform_5(%arg0: i32) -> (i32, i32) {
    %c0_i32 = arith.constant 0 : i32
    %c0_i32_0 = arith.constant 0 : i32
    return %arg0, %c0_i32 : i32, i32
  }
  func.func @transform_6(%arg0: i32) -> (i32, i32) {
    %c0_i32 = arith.constant 0 : i32
    %c0_i32_0 = arith.constant 0 : i32
    return %arg0, %c0_i32 : i32, i32
  }
}

</mosaic_0001>

<llo_original>
// kernel: _multi_similarity_loss.1
$region0: #{_multi_similarity_loss.1}
  #allocation0 [shape = 'u32[]', space=smem, size = 0x4, offset = 0x4, fixed_abs, tag = 'smem constant byte address 0x4 - core index']
  #allocation1 [shape = 'u32[72,128]{1,0:T(1,128)}', space=vmem, size = 0x9000, scoped, tag = 'internal scratch']
  #allocation2 [shape = 's32[1]{0:T(128)S(6)}', space=smem, size = 0x200, scoped, tag = 'scoped memory for _multi_similarity_loss.1']
  %s0 = inlined_call_operand.<no memory space> [shape: s32[1], index: 0, kind: input, shape index: {}]
  %s1 = inlined_call_operand.vmem [shape: f32[96,64], index: 1, kind: input, shape index: {}]
  %s2 = inlined_call_operand.vmem [shape: s32[96,1], index: 2, kind: input, shape index: {}]
  %s3 = inlined_call_operand.vmem [shape: s32[1,96], index: 3, kind: input, shape index: {}]
  %s4 = inlined_call_operand.vmem [shape: f32[96,1], index: 4, kind: output, shape index: {0}]
  %s5 = inlined_call_operand.vmem [shape: f32[96,1], index: 5, kind: output, shape index: {1}]
  %s6 = inlined_call_operand.vmem [shape: f32[96,1], index: 6, kind: output, shape index: {2}]
  %7 = xla_tuple %s4, %s5, %s6
  %s8 = sld [smem:[#allocation0]]
  $region65: #{_multi_similarity_loss.1} parent=0
    _
  %s10 = ssub.s32 1, %s8
  %s11 = scalar_select 0, %s10, %s8
  %12 = sst [smem:[#allocation2]] %s0
  loop: start=0, step=1, limit=5
  $region2: #{_multi_similarity_loss.1} parent=0 // loop_pre_header
    _
  $region3: #{_multi_similarity_loss.1} parent=0 // loop_header
    %s14 = sphi 0, %s18
    %p15 = scmp.ge.s32.totalorder %s14, 5
    %s22 = sphi 0, %s22
    %s24 = sphi 0, %s22
    %s25 = sphi 0, %s24
    %s39 = sphi 0, %s25
    %s43 = sphi 0, %s43
    %s45 = sphi 0, %s43
    %s46 = sphi 0, %s45
    %s60 = sphi 0, %s46
    %s66 = sphi 0, %s68
    %s69 = sphi 0, %s66
    %s70 = sphi 0, %s69
    %s86 = sphi 0, %s70
    %s90 = sphi 0, %s90
    %s92 = sphi 0, %s90
    %s93 = sphi 0, %s92
    %s107 = sphi 0, %s93
    %s113 = sphi 0, %s115
    %s116 = sphi 0, %s113
    %s117 = sphi 0, %s116
    %s133 = sphi 0, %s117
    %s139 = sphi 0, %s141
    %s142 = sphi 0, %s139
    %s143 = sphi 0, %s142
    %s159 = sphi 0, %s143
    %s165 = sphi 0, %s167
    %s168 = sphi 0, %s165
    %s169 = sphi 0, %s168
    %s185 = sphi 0, %s169
  $region4: #{_multi_similarity_loss.1} parent=0 // loop_header_branch
    %17 = sbr.rel (%p15) target = $region8
  $region5: #{_multi_similarity_loss.1} parent=0 // loop_body
    %s19 = ssub.s32 %s14, 1
    %s20 = ssub.s32 %s14, 2
    %s21 = sadd.s32 %s14, 1
    %s23 = sadd.s32 %s22, 1
    %p26 = scmp.eq.s32.totalorder %s14, 2
    %p27 = scmp.ne.s32.totalorder %s22, %s24
    %p28 = scmp.eq.s32.totalorder %s14, 0
    %p29 = por %p27, %p28
    %p30 = scmp.ne.s32.totalorder %s22, %s24
    %p31 = scmp.eq.s32.totalorder %s19, 2
    %p32 = por %p30, %p31
    %p33 = scmp.ne.s32.totalorder %s24, %s25
    %p34 = scmp.eq.s32.totalorder %s19, 0
    %p35 = por %p33, %p34
    %p36 = scmp.ne.s32.totalorder %s24, %s25
    %p37 = scmp.eq.s32.totalorder %s20, 2
    %p38 = por %p36, %p37
    %p40 = scmp.ne.s32.totalorder %s25, %s39
    %p41 = scmp.eq.s32.totalorder %s20, 0
    %p42 = por %p40, %p41
    %s44 = sadd.s32 %s43, 1
    %p47 = scmp.eq.s32.totalorder %s14, 2
    %p48 = scmp.ne.s32.totalorder %s43, %s45
    %p49 = scmp.eq.s32.totalorder %s14, 0
    %p50 = por %p48, %p49
    %p51 = scmp.ne.s32.totalorder %s43, %s45
    %p52 = scmp.eq.s32.totalorder %s19, 2
    %p53 = por %p51, %p52
    %p54 = scmp.ne.s32.totalorder %s45, %s46
    %p55 = scmp.eq.s32.totalorder %s19, 0
    %p56 = por %p54, %p55
    %p57 = scmp.ne.s32.totalorder %s45, %s46
    %p58 = scmp.eq.s32.totalorder %s20, 2
    %p59 = por %p57, %p58
    %p61 = scmp.ne.s32.totalorder %s46, %s60
    %p62 = scmp.eq.s32.totalorder %s20, 0
    %p63 = por %p61, %p62
    %s64 = ssub.s32 %s14, %s21
    %p65 = scmp.eq.s32.totalorder %s64, 0
    %s67 = sadd.s32 %s66, 1
    %s68 = scalar_select %p65, %s66, %s67
    %p71 = pneg %p65
    %p72 = scmp.eq.s32.totalorder %s14, 2
    %p73 = por %p71, %p72
    %p74 = scmp.ne.s32.totalorder %s66, %s69
    %p75 = scmp.eq.s32.totalorder %s14, 0
    %p76 = por %p74, %p75
    %p77 = scmp.ne.s32.totalorder %s66, %s69
    %p78 = scmp.eq.s32.totalorder %s19, 2
    %p79 = por %p77, %p78
    %p80 = scmp.ne.s32.totalorder %s69, %s70
    %p81 = scmp.eq.s32.totalorder %s19, 0
    %p82 = por %p80, %p81
    %p83 = scmp.ne.s32.totalorder %s69, %s70
    %p84 = scmp.eq.s32.totalorder %s20, 2
    %p85 = por %p83, %p84
    %p87 = scmp.ne.s32.totalorder %s70, %s86
    %p88 = scmp.eq.s32.totalorder %s20, 0
    %p89 = por %p87, %p88
    %s91 = sadd.s32 %s90, 1
    %p94 = scmp.eq.s32.totalorder %s14, 2
    %p95 = scmp.ne.s32.totalorder %s90, %s92
    %p96 = scmp.eq.s32.totalorder %s14, 0
    %p97 = por %p95, %p96
    %p98 = scmp.ne.s32.totalorder %s90, %s92
    %p99 = scmp.eq.s32.totalorder %s19, 2
    %p100 = por %p98, %p99
    %p101 = scmp.ne.s32.totalorder %s92, %s93
    %p102 = scmp.eq.s32.totalorder %s19, 0
    %p103 = por %p101, %p102
    %p104 = scmp.ne.s32.totalorder %s92, %s93
    %p105 = scmp.eq.s32.totalorder %s20, 2
    %p106 = por %p104, %p105
    %p108 = scmp.ne.s32.totalorder %s93, %s107
    %p109 = scmp.eq.s32.totalorder %s20, 0
    %p110 = por %p108, %p109
    %s111 = ssub.s32 %s14, %s21
    %p112 = scmp.eq.s32.totalorder %s111, 0
    %s114 = sadd.s32 %s113, 1
    %s115 = scalar_select %p112, %s113, %s114
    %p118 = pneg %p112
    %p119 = scmp.eq.s32.totalorder %s14, 2
    %p120 = por %p118, %p119
    %p121 = scmp.ne.s32.totalorder %s113, %s116
    %p122 = scmp.eq.s32.totalorder %s14, 0
    %p123 = por %p121, %p122
    %p124 = scmp.ne.s32.totalorder %s113, %s116
    %p125 = scmp.eq.s32.totalorder %s19, 2
    %p126 = por %p124, %p125
    %p127 = scmp.ne.s32.totalorder %s116, %s117
    %p128 = scmp.eq.s32.totalorder %s19, 0
    %p129 = por %p127, %p128
    %p130 = scmp.ne.s32.totalorder %s116, %s117
    %p131 = scmp.eq.s32.totalorder %s20, 2
    %p132 = por %p130, %p131
    %p134 = scmp.ne.s32.totalorder %s117, %s133
    %p135 = scmp.eq.s32.totalorder %s20, 0
    %p136 = por %p134, %p135
    %s137 = ssub.s32 %s14, %s21
    %p138 = scmp.eq.s32.totalorder %s137, 0
    %s140 = sadd.s32 %s139, 1
    %s141 = scalar_select %p138, %s139, %s140
    %p144 = pneg %p138
    %p145 = scmp.eq.s32.totalorder %s14, 2
    %p146 = por %p144, %p145
    %p147 = scmp.ne.s32.totalorder %s139, %s142
    %p148 = scmp.eq.s32.totalorder %s14, 0
    %p149 = por %p147, %p148
    %p150 = scmp.ne.s32.totalorder %s139, %s142
    %p151 = scmp.eq.s32.totalorder %s19, 2
    %p152 = por %p150, %p151
    %p153 = scmp.ne.s32.totalorder %s142, %s143
    %p154 = scmp.eq.s32.totalorder %s19, 0
    %p155 = por %p153, %p154
    %p156 = scmp.ne.s32.totalorder %s142, %s143
    %p157 = scmp.eq.s32.totalorder %s20, 2
    %p158 = por %p156, %p157
    %p160 = scmp.ne.s32.totalorder %s143, %s159
    %p161 = scmp.eq.s32.totalorder %s20, 0
    %p162 = por %p160, %p161
    %s163 = ssub.s32 %s14, %s21
    %p164 = scmp.eq.s32.totalorder %s163, 0
    %s166 = sadd.s32 %s165, 1
    %s167 = scalar_select %p164, %s165, %s166
    %p170 = pneg %p164
    %p171 = scmp.eq.s32.totalorder %s14, 2
    %p172 = por %p170, %p171
    %p173 = scmp.ne.s32.totalorder %s165, %s168
    %p174 = scmp.eq.s32.totalorder %s14, 0
    %p175 = por %p173, %p174
    %p176 = scmp.ne.s32.totalorder %s165, %s168
    %p177 = scmp.eq.s32.totalorder %s19, 2
    %p178 = por %p176, %p177
    %p179 = scmp.ne.s32.totalorder %s168, %s169
    %p180 = scmp.eq.s32.totalorder %s19, 0
    %p181 = por %p179, %p180
    %p182 = scmp.ne.s32.totalorder %s168, %s169
    %p183 = scmp.eq.s32.totalorder %s20, 2
    %p184 = por %p182, %p183
    %p186 = scmp.ne.s32.totalorder %s169, %s185
    %p187 = scmp.eq.s32.totalorder %s20, 0
    %p188 = por %p186, %p187
    %p189 = scmp.le.s32.totalorder 1, %s14
    %p190 = scmp.lt.s32.totalorder %s14, 4
    %p191 = pnand %p189, %p190
    %p192 = pneg %p191
    // Predicated region
    $region9: #{_multi_similarity_loss.1} parent=5 // pred_check
      _
    $region10: #{_multi_similarity_loss.1} parent=5 // pred_check_branch
      %194 = sbr.rel (%p191) target = $region12
    $region11: #{_multi_similarity_loss.1} parent=5 // pred_region
      %s195 = ssub.s32 %s14, 1
      // Predicated region
      $region13: #{_multi_similarity_loss.1} parent=11 // pred_check
        %p196 = pneg %p35
      $region14: #{_multi_similarity_loss.1} parent=11 // pred_check_branch
        %198 = sbr.rel (%p196) target = $region16
      $region15: #{_multi_similarity_loss.1} parent=11 // pred_region
        _
      $region16: #{_multi_similarity_loss.1} parent=11 // pred_fallthru
        _
      // Predicated region
      $region17: #{_multi_similarity_loss.1} parent=11 // pred_check
        %p199 = pneg %p56
      $region18: #{_multi_similarity_loss.1} parent=11 // pred_check_branch
        %201 = sbr.rel (%p199) target = $region20
      $region19: #{_multi_similarity_loss.1} parent=11 // pred_region
        _
      $region20: #{_multi_similarity_loss.1} parent=11 // pred_fallthru
        _
      // Predicated region
      $region21: #{_multi_similarity_loss.1} parent=11 // pred_check
        %p202 = pneg %p103
      $region22: #{_multi_similarity_loss.1} parent=11 // pred_check_branch
        %204 = sbr.rel (%p202) target = $region24
      $region23: #{_multi_similarity_loss.1} parent=11 // pred_region
        _
      $region24: #{_multi_similarity_loss.1} parent=11 // pred_fallthru
        _
    $region12: #{_multi_similarity_loss.1} parent=5 // pred_fallthru
      _
    %p205 = scmp.lt.s32.totalorder %s14, 3
    // Predicated region
    $region25: #{_multi_similarity_loss.1} parent=5 // pred_check
      %p206 = pneg %p205
    $region26: #{_multi_similarity_loss.1} parent=5 // pred_check_branch
      %208 = sbr.rel (%p206) target = $region28
    $region27: #{_multi_similarity_loss.1} parent=5 // pred_region
      // Predicated region
      $region29: #{_multi_similarity_loss.1} parent=27 // pred_check
        %p209 = pneg %p76
      $region30: #{_multi_similarity_loss.1} parent=27 // pred_check_branch
        %211 = sbr.rel (%p209) target = $region32
      $region31: #{_multi_similarity_loss.1} parent=27 // pred_region
        %s212 = smul.u32 4, %s14
        %p213 = scmp.lt.s32.totalorder %s212, 11
        %s214 = scalar_select %p213, %s212, 11
        %s215 = smul.addr %s214, 8
        %s216 = scalar_lea.vmem %s2, %s215
        %s217 = smul.u32 4, %s14
      $region32: #{_multi_similarity_loss.1} parent=27 // pred_fallthru
        _
    $region28: #{_multi_similarity_loss.1} parent=5 // pred_fallthru
      _
    %p218 = scmp.le.s32.totalorder 1, %s14
    %p219 = scmp.lt.s32.totalorder %s14, 4
    %p220 = pnand %p218, %p219
    %p221 = pneg %p220
    // Predicated region
    $region33: #{_multi_similarity_loss.1} parent=5 // pred_check
      _
    $region34: #{_multi_similarity_loss.1} parent=5 // pred_check_branch
      %223 = sbr.rel (%p220) target = $region36
    $region35: #{_multi_similarity_loss.1} parent=5 // pred_region
      %s224 = ssub.s32 %s14, 1
      %p225 = pneg %p35
      %p226 = pneg %p32
      %p227 = pneg %p56
      %p228 = pneg %p53
      %s229 = smul.u32 4, %s19
      %p230 = scmp.lt.s32.totalorder %s229, 11
      %s231 = scalar_select %p230, %s229, 11
      %s232 = smul.addr %s231, 8
      %s233 = scalar_lea.vmem %s2, %s232
      %p234 = pneg %p82
      %p235 = pneg %p79
      %p236 = pneg %p103
      %p237 = pneg %p100
      %p238 = pneg %p129
      %p239 = pneg %p126
      %s240 = smul.u32 4, %s19
      %p241 = scmp.lt.s32.totalorder %s240, 11
      %s242 = scalar_select %p241, %s240, 11
      %s243 = smul.addr %s242, 8
      %s244 = scalar_lea.vmem %s4, %s243
      %p245 = pneg %p155
      %p246 = pneg %p152
      %s247 = smul.u32 4, %s19
      %p248 = scmp.lt.s32.totalorder %s247, 11
      %s249 = scalar_select %p248, %s247, 11
      %s250 = smul.addr %s249, 8
      %s251 = scalar_lea.vmem %s5, %s250
      %p252 = pneg %p181
      %p253 = pneg %p178
      %s254 = smul.u32 4, %s19
      %p255 = scmp.lt.s32.totalorder %s254, 11
      %s256 = scalar_select %p255, %s254, 11
      %s257 = smul.addr %s256, 8
      %s258 = scalar_lea.vmem %s6, %s257
      %s259 = smul.u32 4, %s19
      %p260 = scmp.lt.s32.totalorder %s259, 11
      %s261 = scalar_select %p260, %s259, 11
      %s262 = smul.addr %s261, 8
      %s263 = scalar_lea.vmem %s2, %s262
      %s264 = smul.u32 4, %s19
      %s265 = smul.u32 4, %s19
      %p266 = scmp.lt.s32.totalorder %s265, 11
      %s267 = scalar_select %p266, %s265, 11
      %s268 = smul.addr %s267, 8
      %s269 = scalar_lea.vmem %s4, %s268
      %s270 = smul.u32 4, %s19
      %s271 = smul.u32 4, %s19
      %p272 = scmp.lt.s32.totalorder %s271, 11
      %s273 = scalar_select %p272, %s271, 11
      %s274 = smul.addr %s273, 8
      %s275 = scalar_lea.vmem %s5, %s274
      %s276 = smul.u32 4, %s19
      %s277 = smul.u32 4, %s19
      %p278 = scmp.lt.s32.totalorder %s277, 11
      %s279 = scalar_select %p278, %s277, 11
      %s280 = smul.addr %s279, 8
      %s281 = scalar_lea.vmem %s6, %s280
      %s282 = smul.u32 4, %s19
      %s283 = sld [smem:[#allocation2]]
      %s284 = smul.u32 %s19, 32
      %s285 = scalar_lea.vmem %s1, %s284
      %v286 = vld [vmem:[%s285] sm:$0xff]
      %v287 = vld [vmem:[%s285 + $0x8] sm:$0xff]
      %v288 = vld [vmem:[%s285 + $0x10] sm:$0xff]
      %v289 = vld [vmem:[%s285 + $0x18] sm:$0xff]
      %v290 = vld [vmem:[%s1] sm:$0xff]
      %v291 = vld [vmem:[%s1 + $0x8] sm:$0xff]
      %v292 = vld [vmem:[%s1 + $0x10] sm:$0xff]
      %v293 = vld [vmem:[%s1 + $0x18] sm:$0xff]
      %v294 = vld [vmem:[%s1 + $0x20] sm:$0xff]
      %v295 = vld [vmem:[%s1 + $0x28] sm:$0xff]
      %v296 = vld [vmem:[%s1 + $0x30] sm:$0xff]
      %v297 = vld [vmem:[%s1 + $0x38] sm:$0xff]
      %v298 = vld [vmem:[%s1 + $0x40] sm:$0xff]
      %v299 = vld [vmem:[%s1 + $0x48] sm:$0xff]
      %v300 = vld [vmem:[%s1 + $0x50] sm:$0xff]
      %v301 = vld [vmem:[%s1 + $0x58] sm:$0xff]
      %vm302 = vcmask 523264
      %v304 = vsel %vm302, %v286, 0
      %v307 = vsel %vm302, %v287, 0
      %v310 = vsel %vm302, %v288, 0
      %v313 = vsel %vm302, %v289, 0
      %v316 = vsel %vm302, %v290, 0
      %v319 = vsel %vm302, %v291, 0
      %v322 = vsel %vm302, %v292, 0
      %v325 = vsel %vm302, %v293, 0
      %v328 = vsel %vm302, %v294, 0
      %v331 = vsel %vm302, %v295, 0
      %v334 = vsel %vm302, %v296, 0
      %v337 = vsel %vm302, %v297, 0
      %v340 = vsel %vm302, %v298, 0
      %v343 = vsel %vm302, %v299, 0
      %v346 = vsel %vm302, %v300, 0
      %v349 = vsel %vm302, %v301, 0
      %351 = vmatpush.xpose.msra.mxu0 0.0
      %352 = vmatpush.xpose.msra.mxu0 0.0
      %353 = vmatpush.xpose.msra.mxu0 0.0
      %354 = vmatpush.xpose.msra.mxu0 0.0
      %355 = vmatpush.xpose.msra.mxu0 %v349
      %356 = vmatpush.xpose.msra.mxu0 %v346
      %357 = vmatpush.xpose.msra.mxu0 %v343
      %358 = vmatpush.xpose.msra.mxu0 %v340
      %359 = vmatpush.xpose.msra.mxu0 %v337
      %360 = vmatpush.xpose.msra.mxu0 %v334
      %361 = vmatpush.xpose.msra.mxu0 %v331
      %362 = vmatpush.xpose.msra.mxu0 %v328
      %363 = vmatpush.xpose.msra.mxu0 %v325
      %364 = vmatpush.xpose.msra.mxu0 %v322
      %365 = vmatpush.xpose.msra.mxu0 %v319
      %366 = vmatpush.xpose.msra.mxu0 %v316
      %367 = vmatmul.f32.gmra.mxu0 %v304
      %v368 = vpop.f32.mrf.mxu0
      %v369 = vadd.f32 0.0, %v368
      %370 = vmatmul.f32.gmra.mxu0 %v307
      %v371 = vpop.f32.mrf.mxu0
      %v372 = vadd.f32 0.0, %v371
      %373 = vmatmul.f32.gmra.mxu0 %v310
      %v374 = vpop.f32.mrf.mxu0
      %v375 = vadd.f32 0.0, %v374
      %376 = vmatmul.f32.gmra.mxu0 %v313
      %v377 = vpop.f32.mrf.mxu0
      %v378 = vadd.f32 0.0, %v377
      %379 = vdwg.mxu0
      %v380 = vld [vmem:[%s263] sm:$0xff]
      %v381 = vld [vmem:[%s263 + $0x8] sm:$0xff]
      %v382 = vld [vmem:[%s263 + $0x10] sm:$0xff]
      %v383 = vld [vmem:[%s263 + $0x18] sm:$0xff]
      %v384 = vld [vmem:[%s3] sm:$0x1]
      %385 = vset.pattern.permute.xlu0 0
      %386 = vperm.xlu0 %385, %v380
      %v387 = vpop.permute.xlu0 %386
      %388 = vset.pattern.permute.xlu0 0
      %389 = vperm.xlu0 %388, %v381
      %v390 = vpop.permute.xlu0 %389
      %391 = vset.pattern.permute.xlu0 0
      %392 = vperm.xlu0 %391, %v382
      %v393 = vpop.permute.xlu0 %392
      %394 = vset.pattern.permute.xlu0 0
      %395 = vperm.xlu0 %394, %v383
      %v396 = vpop.permute.xlu0 %395
      %v397 = vperm.slane %v384, 0
      %vm398 = vcmp.eq.s32.totalorder %v387, %v397
      %vm399 = vcmp.eq.s32.totalorder %v390, %v397
      %vm400 = vcmp.eq.s32.totalorder %v393, %v397
      %vm401 = vcmp.eq.s32.totalorder %v396, %v397
      %v402 = vlaneseq
      %v403 = vand.u32 %v402, 127
      %v404 = vlaneseq
      %v405 = vshrl.u32 %v404, 7
      %v406 = vadd.s32 %v405, 8
      %v407 = vadd.s32 %v405, 16
      %v408 = vadd.s32 %v405, 24
      %v409 = vstv %s283
      %vm410 = vcmp.lt.s32.totalorder %v403, %v409
      %v411 = vstv %s284
      %v412 = vadd.s32 %v405, %v411
      %v413 = vadd.s32 %v406, %v411
      %v414 = vadd.s32 %v407, %v411
      %v415 = vadd.s32 %v408, %v411
      %vm416 = vcmp.ne.s32.totalorder %v403, %v412
      %vm417 = vcmp.ne.s32.totalorder %v403, %v413
      %vm418 = vcmp.ne.s32.totalorder %v403, %v414
      %vm419 = vcmp.ne.s32.totalorder %v403, %v415
      %vm420 = vmand %vm398, %vm416
      %vm421 = vmand %vm399, %vm417
      %vm422 = vmand %vm400, %vm418
      %vm423 = vmand %vm401, %vm419
      %vm424 = vmand %vm420, %vm410
      %vm425 = vmand %vm421, %vm410
      %vm426 = vmand %vm422, %vm410
      %vm427 = vmand %vm423, %vm410
      %vm428 = vmxor %vm398, 1
      %vm429 = vmxor %vm399, 1
      %vm430 = vmxor %vm400, 1
      %vm431 = vmxor %vm401, 1
      %vm432 = vmand %vm428, %vm410
      %vm433 = vmand %vm429, %vm410
      %vm434 = vmand %vm430, %vm410
      %vm435 = vmand %vm431, %vm410
      %v436 = vsel %vm432, %v369, -1e+30
      %v437 = vsel %vm433, %v372, -1e+30
      %v438 = vsel %vm434, %v375, -1e+30
      %v439 = vsel %vm435, %v378, -1e+30
      %vm440 = vcmask 785408
      %v441 = vsel %vm440, %v436, -inf
      %442 = vmax.xlane.f32.xlu0 %v441
      %v443 = vpop.xlane.xlu0 %442
      %v444 = vsel %vm440, %v437, -inf
      %445 = vmax.xlane.f32.xlu0 %v444
      %v446 = vpop.xlane.xlu0 %445
      %v447 = vsel %vm440, %v438, -inf
      %448 = vmax.xlane.f32.xlu0 %v447
      %v449 = vpop.xlane.xlu0 %448
      %v450 = vsel %vm440, %v439, -inf
      %451 = vmax.xlane.f32.xlu0 %v450
      %v452 = vpop.xlane.xlu0 %451
      %v453 = vsel %vm424, %v369, 1e+30
      %v454 = vsel %vm425, %v372, 1e+30
      %v455 = vsel %vm426, %v375, 1e+30
      %v456 = vsel %vm427, %v378, 1e+30
      %v457 = vsel %vm440, %v453, inf
      %458 = vmin.xlane.f32.xlu0 %v457
      %v459 = vpop.xlane.xlu0 %458
      %v460 = vsel %vm440, %v454, inf
      %461 = vmin.xlane.f32.xlu0 %v460
      %v462 = vpop.xlane.xlu0 %461
      %v463 = vsel %vm440, %v455, inf
      %464 = vmin.xlane.f32.xlu0 %v463
      %v465 = vpop.xlane.xlu0 %464
      %v466 = vsel %vm440, %v456, inf
      %467 = vmin.xlane.f32.xlu0 %v466
      %v468 = vpop.xlane.xlu0 %467
      %v469 = vsub.f32 %v369, 0.1
      %v470 = vsub.f32 %v372, 0.1
      %v471 = vsub.f32 %v375, 0.1
      %v472 = vsub.f32 %v378, 0.1
      %vm473 = vcmp.lt.f32.partialorder %v469, %v443
      %vm474 = vcmp.lt.f32.partialorder %v470, %v446
      %vm475 = vcmp.lt.f32.partialorder %v471, %v449
      %vm476 = vcmp.lt.f32.partialorder %v472, %v452
      %vm477 = vmand %vm424, %vm473
      %vm478 = vmand %vm425, %vm474
      %vm479 = vmand %vm426, %vm475
      %vm480 = vmand %vm427, %vm476
      %v481 = vadd.f32 %v369, 0.1
      %v482 = vadd.f32 %v372, 0.1
      %v483 = vadd.f32 %v375, 0.1
      %v484 = vadd.f32 %v378, 0.1
      %vm485 = vcmp.gt.f32.partialorder %v481, %v459
      %vm486 = vcmp.gt.f32.partialorder %v482, %v462
      %vm487 = vcmp.gt.f32.partialorder %v483, %v465
      %vm488 = vcmp.gt.f32.partialorder %v484, %v468
      %vm489 = vmand %vm432, %vm485
      %vm490 = vmand %vm433, %vm486
      %vm491 = vmand %vm434, %vm487
      %vm492 = vmand %vm435, %vm488
      %v493 = vsel %vm477, 1, 0
      %v494 = vsel %vm478, 1, 0
      %v495 = vsel %vm479, 1, 0
      %v496 = vsel %vm480, 1, 0
      %v497 = vcvt.s32.f32 %v493
      %v498 = vcvt.s32.f32 %v494
      %v499 = vcvt.s32.f32 %v495
      %v500 = vcvt.s32.f32 %v496
      %v501 = vsel %vm440, %v497, 0.0
      %502 = vadd.xlane.f32.xlu0 %v501
      %v503 = vpop.xlane.xlu0 %502
      %v504 = vsel %vm440, %v498, 0.0
      %505 = vadd.xlane.f32.xlu0 %v504
      %v506 = vpop.xlane.xlu0 %505
      %v507 = vsel %vm440, %v499, 0.0
      %508 = vadd.xlane.f32.xlu0 %v507
      %v509 = vpop.xlane.xlu0 %508
      %v510 = vsel %vm440, %v500, 0.0
      %511 = vadd.xlane.f32.xlu0 %v510
      %v512 = vpop.xlane.xlu0 %511
      %v513 = vsel %vm489, 1, 0
      %v514 = vsel %vm490, 1, 0
      %v515 = vsel %vm491, 1, 0
      %v516 = vsel %vm492, 1, 0
      %v517 = vcvt.s32.f32 %v513
      %v518 = vcvt.s32.f32 %v514
      %v519 = vcvt.s32.f32 %v515
      %v520 = vcvt.s32.f32 %v516
      %v521 = vsel %vm440, %v517, 0.0
      %522 = vadd.xlane.f32.xlu0 %v521
      %v523 = vpop.xlane.xlu0 %522
      %v524 = vsel %vm440, %v518, 0.0
      %525 = vadd.xlane.f32.xlu0 %v524
      %v526 = vpop.xlane.xlu0 %525
      %v527 = vsel %vm440, %v519, 0.0
      %528 = vadd.xlane.f32.xlu0 %v527
      %v529 = vpop.xlane.xlu0 %528
      %v530 = vsel %vm440, %v520, 0.0
      %531 = vadd.xlane.f32.xlu0 %v530
      %v532 = vpop.xlane.xlu0 %531
      %v533 = vsub.f32 0.5, %v369
      %v534 = vsub.f32 0.5, %v372
      %v535 = vsub.f32 0.5, %v375
      %v536 = vsub.f32 0.5, %v378
      %v537 = vmul.f32 %v533, 2.0
      %v538 = vmul.f32 %v534, 2.0
      %v539 = vmul.f32 %v535, 2.0
      %v540 = vmul.f32 %v536, 2.0
      %vm541 = vcmp.gt.f32.partialorder %v503, 0.0
      %vm542 = vcmp.gt.f32.partialorder %v506, 0.0
      %vm543 = vcmp.gt.f32.partialorder %v509, 0.0
      %vm544 = vcmp.gt.f32.partialorder %v512, 0.0
      %v545 = vsel %vm477, %v537, -1e+30
      %v546 = vsel %vm478, %v538, -1e+30
      %v547 = vsel %vm479, %v539, -1e+30
      %v548 = vsel %vm480, %v540, -1e+30
      %v549 = vsel %vm440, %v545, -inf
      %550 = vmax.xlane.f32.xlu0 %v549
      %v551 = vpop.xlane.xlu0 %550
      %v552 = vsel %vm440, %v546, -inf
      %553 = vmax.xlane.f32.xlu0 %v552
      %v554 = vpop.xlane.xlu0 %553
      %v555 = vsel %vm440, %v547, -inf
      %556 = vmax.xlane.f32.xlu0 %v555
      %v557 = vpop.xlane.xlu0 %556
      %v558 = vsel %vm440, %v548, -inf
      %559 = vmax.xlane.f32.xlu0 %v558
      %v560 = vpop.xlane.xlu0 %559
      %v561 = vmax.f32 %v551, 0.0
      %v562 = vmax.f32 %v554, 0.0
      %v563 = vmax.f32 %v557, 0.0
      %v564 = vmax.f32 %v560, 0.0
      %v565 = vsub.f32 %v537, %v561
      %v566 = vsub.f32 %v538, %v562
      %v567 = vsub.f32 %v539, %v563
      %v568 = vsub.f32 %v540, %v564
      %v569 = vmul.f32 %v565, 1.442695
      %v570 = vpow.pop %v569
      %v571 = vmul.f32 %v566, 1.442695
      %v572 = vpow.pop %v571
      %v573 = vmul.f32 %v567, 1.442695
      %v574 = vpow.pop %v573
      %v575 = vmul.f32 %v568, 1.442695
      %v576 = vpow.pop %v575
      %v577 = vsel %vm477, %v570, 0.0
      %v578 = vsel %vm478, %v572, 0.0
      %v579 = vsel %vm479, %v574, 0.0
      %v580 = vsel %vm480, %v576, 0.0
      %v581 = vsel %vm440, %v577, 0.0
      %582 = vadd.xlane.f32.xlu0 %v581
      %v583 = vpop.xlane.xlu0 %582
      %v584 = vsel %vm440, %v578, 0.0
      %585 = vadd.xlane.f32.xlu0 %v584
      %v586 = vpop.xlane.xlu0 %585
      %v587 = vsel %vm440, %v579, 0.0
      %588 = vadd.xlane.f32.xlu0 %v587
      %v589 = vpop.xlane.xlu0 %588
      %v590 = vsel %vm440, %v580, 0.0
      %591 = vadd.xlane.f32.xlu0 %v590
      %v592 = vpop.xlane.xlu0 %591
      %v593 = vsub.f32 0.0, %v561
      %v594 = vsub.f32 0.0, %v562
      %v595 = vsub.f32 0.0, %v563
      %v596 = vsub.f32 0.0, %v564
      %v597 = vmul.f32 %v593, 1.442695
      %v598 = vpow.pop %v597
      %v599 = vmul.f32 %v594, 1.442695
      %v600 = vpow.pop %v599
      %v601 = vmul.f32 %v595, 1.442695
      %v602 = vpow.pop %v601
      %v603 = vmul.f32 %v596, 1.442695
      %v604 = vpow.pop %v603
      %v605 = vadd.f32 %v583, %v598
      %v606 = vadd.f32 %v586, %v600
      %v607 = vadd.f32 %v589, %v602
      %v608 = vadd.f32 %v592, %v604
      %v609 = vlog2.pop %v605
      %v610 = vmul.f32 %v609, 0.6931472
      %v611 = vlog2.pop %v606
      %v612 = vmul.f32 %v611, 0.6931472
      %v613 = vlog2.pop %v607
      %v614 = vmul.f32 %v613, 0.6931472
      %v615 = vlog2.pop %v608
      %v616 = vmul.f32 %v615, 0.6931472
      %v617 = vadd.f32 %v561, %v610
      %v618 = vadd.f32 %v562, %v612
      %v619 = vadd.f32 %v563, %v614
      %v620 = vadd.f32 %v564, %v616
      %v621 = vsel %vm541, %v617, 0.0
      %v622 = vsel %vm542, %v618, 0.0
      %v623 = vsel %vm543, %v619, 0.0
      %v624 = vsel %vm544, %v620, 0.0
      %v625 = vmul.f32 %v621, 0.5
      %v626 = vmul.f32 %v622, 0.5
      %v627 = vmul.f32 %v623, 0.5
      %v628 = vmul.f32 %v624, 0.5
      %v629 = vsub.f32 %v369, 0.5
      %v630 = vsub.f32 %v372, 0.5
      %v631 = vsub.f32 %v375, 0.5
      %v632 = vsub.f32 %v378, 0.5
      %v633 = vmul.f32 %v629, 50.0
      %v634 = vmul.f32 %v630, 50.0
      %v635 = vmul.f32 %v631, 50.0
      %v636 = vmul.f32 %v632, 50.0
      %vm637 = vcmp.gt.f32.partialorder %v523, 0.0
      %vm638 = vcmp.gt.f32.partialorder %v526, 0.0
      %vm639 = vcmp.gt.f32.partialorder %v529, 0.0
      %vm640 = vcmp.gt.f32.partialorder %v532, 0.0
      %v641 = vsel %vm489, %v633, -1e+30
      %v642 = vsel %vm490, %v634, -1e+30
      %v643 = vsel %vm491, %v635, -1e+30
      %v644 = vsel %vm492, %v636, -1e+30
      %v645 = vsel %vm440, %v641, -inf
      %646 = vmax.xlane.f32.xlu0 %v645
      %v647 = vpop.xlane.xlu0 %646
      %v648 = vsel %vm440, %v642, -inf
      %649 = vmax.xlane.f32.xlu0 %v648
      %v650 = vpop.xlane.xlu0 %649
      %v651 = vsel %vm440, %v643, -inf
      %652 = vmax.xlane.f32.xlu0 %v651
      %v653 = vpop.xlane.xlu0 %652
      %v654 = vsel %vm440, %v644, -inf
      %655 = vmax.xlane.f32.xlu0 %v654
      %v656 = vpop.xlane.xlu0 %655
      %v657 = vmax.f32 %v647, 0.0
      %v658 = vmax.f32 %v650, 0.0
      %v659 = vmax.f32 %v653, 0.0
      %v660 = vmax.f32 %v656, 0.0
      %v661 = vsub.f32 %v633, %v657
      %v662 = vsub.f32 %v634, %v658
      %v663 = vsub.f32 %v635, %v659
      %v664 = vsub.f32 %v636, %v660
      %v665 = vmul.f32 %v661, 1.442695
      %v666 = vpow.pop %v665
      %v667 = vmul.f32 %v662, 1.442695
      %v668 = vpow.pop %v667
      %v669 = vmul.f32 %v663, 1.442695
      %v670 = vpow.pop %v669
      %v671 = vmul.f32 %v664, 1.442695
      %v672 = vpow.pop %v671
      %v673 = vsel %vm489, %v666, 0.0
      %v674 = vsel %vm490, %v668, 0.0
      %v675 = vsel %vm491, %v670, 0.0
      %v676 = vsel %vm492, %v672, 0.0
      %v677 = vsel %vm440, %v673, 0.0
      %678 = vadd.xlane.f32.xlu0 %v677
      %v679 = vpop.xlane.xlu0 %678
      %v680 = vsel %vm440, %v674, 0.0
      %681 = vadd.xlane.f32.xlu0 %v680
      %v682 = vpop.xlane.xlu0 %681
      %v683 = vsel %vm440, %v675, 0.0
      %684 = vadd.xlane.f32.xlu0 %v683
      %v685 = vpop.xlane.xlu0 %684
      %v686 = vsel %vm440, %v676, 0.0
      %687 = vadd.xlane.f32.xlu0 %v686
      %v688 = vpop.xlane.xlu0 %687
      %v689 = vsub.f32 0.0, %v657
      %v690 = vsub.f32 0.0, %v658
      %v691 = vsub.f32 0.0, %v659
      %v692 = vsub.f32 0.0, %v660
      %v693 = vmul.f32 %v689, 1.442695
      %v694 = vpow.pop %v693
      %v695 = vmul.f32 %v690, 1.442695
      %v696 = vpow.pop %v695
      %v697 = vmul.f32 %v691, 1.442695
      %v698 = vpow.pop %v697
      %v699 = vmul.f32 %v692, 1.442695
      %v700 = vpow.pop %v699
      %v701 = vadd.f32 %v679, %v694
      %v702 = vadd.f32 %v682, %v696
      %v703 = vadd.f32 %v685, %v698
      %v704 = vadd.f32 %v688, %v700
      %v705 = vlog2.pop %v701
      %v706 = vmul.f32 %v705, 0.6931472
      %v707 = vlog2.pop %v702
      %v708 = vmul.f32 %v707, 0.6931472
      %v709 = vlog2.pop %v703
      %v710 = vmul.f32 %v709, 0.6931472
      %v711 = vlog2.pop %v704
      %v712 = vmul.f32 %v711, 0.6931472
      %v713 = vadd.f32 %v657, %v706
      %v714 = vadd.f32 %v658, %v708
      %v715 = vadd.f32 %v659, %v710
      %v716 = vadd.f32 %v660, %v712
      %v717 = vsel %vm637, %v713, 0.0
      %v718 = vsel %vm638, %v714, 0.0
      %v719 = vsel %vm639, %v715, 0.0
      %v720 = vsel %vm640, %v716, 0.0
      %v721 = vmul.f32 %v717, 0.02
      %v722 = vmul.f32 %v718, 0.02
      %v723 = vmul.f32 %v719, 0.02
      %v724 = vmul.f32 %v720, 0.02
      %v725 = vadd.f32 %v625, %v721
      %v726 = vadd.f32 %v626, %v722
      %v727 = vadd.f32 %v627, %v723
      %v728 = vadd.f32 %v628, %v724
      %vm729 = vcmask 7168
      %730 = vst.msk [vmem:[%s269] sm:$0xff] %vm729, %v725
      %731 = vst.msk [vmem:[%s269 + $0x8] sm:$0xff] %vm729, %v726
      %732 = vst.msk [vmem:[%s269 + $0x10] sm:$0xff] %vm729, %v727
      %733 = vst.msk [vmem:[%s269 + $0x18] sm:$0xff] %vm729, %v728
      %734 = vst.msk [vmem:[%s275] sm:$0xff] %vm729, %v503
      %735 = vst.msk [vmem:[%s275 + $0x8] sm:$0xff] %vm729, %v506
      %736 = vst.msk [vmem:[%s275 + $0x10] sm:$0xff] %vm729, %v509
      %737 = vst.msk [vmem:[%s275 + $0x18] sm:$0xff] %vm729, %v512
      %738 = vst.msk [vmem:[%s281] sm:$0xff] %vm729, %v523
      %739 = vst.msk [vmem:[%s281 + $0x8] sm:$0xff] %vm729, %v526
      %740 = vst.msk [vmem:[%s281 + $0x10] sm:$0xff] %vm729, %v529
      %741 = vst.msk [vmem:[%s281 + $0x18] sm:$0xff] %vm729, %v532
      %s742 = smul.u32 4, %s19
      %p743 = scmp.lt.s32.totalorder %s742, 11
      %s744 = scalar_select %p743, %s742, 11
      %s745 = smul.addr %s744, 8
      %s746 = scalar_lea.vmem %s4, %s745
      %s747 = smul.u32 4, %s19
      %p748 = scmp.lt.s32.totalorder %s747, 11
      %s749 = scalar_select %p748, %s747, 11
      %s750 = smul.addr %s749, 8
      %s751 = scalar_lea.vmem %s5, %s750
      %s752 = smul.u32 4, %s19
      %p753 = scmp.lt.s32.totalorder %s752, 11
      %s754 = scalar_select %p753, %s752, 11
      %s755 = smul.addr %s754, 8
      %s756 = scalar_lea.vmem %s6, %s755
      // Predicated region
      $region37: #{_multi_similarity_loss.1} parent=35 // pred_check
        %p757 = pneg %p126
      $region38: #{_multi_similarity_loss.1} parent=35 // pred_check_branch
        %759 = sbr.rel (%p757) target = $region40
      $region39: #{_multi_similarity_loss.1} parent=35 // pred_region
        %s760 = smul.u32 4, %s19
      $region40: #{_multi_similarity_loss.1} parent=35 // pred_fallthru
        _
      // Predicated region
      $region41: #{_multi_similarity_loss.1} parent=35 // pred_check
        %p761 = pneg %p152
      $region42: #{_multi_similarity_loss.1} parent=35 // pred_check_branch
        %763 = sbr.rel (%p761) target = $region44
      $region43: #{_multi_similarity_loss.1} parent=35 // pred_region
        %s764 = smul.u32 4, %s19
      $region44: #{_multi_similarity_loss.1} parent=35 // pred_fallthru
        _
      // Predicated region
      $region45: #{_multi_similarity_loss.1} parent=35 // pred_check
        %p765 = pneg %p178
      $region46: #{_multi_similarity_loss.1} parent=35 // pred_check_branch
        %767 = sbr.rel (%p765) target = $region48
      $region47: #{_multi_similarity_loss.1} parent=35 // pred_region
        %s768 = smul.u32 4, %s19
      $region48: #{_multi_similarity_loss.1} parent=35 // pred_fallthru
        _
    $region36: #{_multi_similarity_loss.1} parent=5 // pred_fallthru
      _
    %p769 = scmp.le.s32.totalorder 2, %s14
    // Predicated region
    $region49: #{_multi_similarity_loss.1} parent=5 // pred_check
      %p770 = pneg %p769
    $region50: #{_multi_similarity_loss.1} parent=5 // pred_check_branch
      %772 = sbr.rel (%p770) target = $region52
    $region51: #{_multi_similarity_loss.1} parent=5 // pred_region
      %s773 = ssub.s32 %s14, 2
      // Predicated region
      $region53: #{_multi_similarity_loss.1} parent=51 // pred_check
        %p774 = pneg %p132
      $region54: #{_multi_similarity_loss.1} parent=51 // pred_check_branch
        %776 = sbr.rel (%p774) target = $region56
      $region55: #{_multi_similarity_loss.1} parent=51 // pred_region
        %s777 = smul.u32 4, %s20
        %p778 = scmp.lt.s32.totalorder %s777, 11
        %s779 = scalar_select %p778, %s777, 11
        %s780 = smul.addr %s779, 8
        %s781 = scalar_lea.vmem %s4, %s780
      $region56: #{_multi_similarity_loss.1} parent=51 // pred_fallthru
        _
      // Predicated region
      $region57: #{_multi_similarity_loss.1} parent=51 // pred_check
        %p782 = pneg %p158
      $region58: #{_multi_similarity_loss.1} parent=51 // pred_check_branch
        %784 = sbr.rel (%p782) target = $region60
      $region59: #{_multi_similarity_loss.1} parent=51 // pred_region
        %s785 = smul.u32 4, %s20
        %p786 = scmp.lt.s32.totalorder %s785, 11
        %s787 = scalar_select %p786, %s785, 11
        %s788 = smul.addr %s787, 8
        %s789 = scalar_lea.vmem %s5, %s788
      $region60: #{_multi_similarity_loss.1} parent=51 // pred_fallthru
        _
      // Predicated region
      $region61: #{_multi_similarity_loss.1} parent=51 // pred_check
        %p790 = pneg %p184
      $region62: #{_multi_similarity_loss.1} parent=51 // pred_check_branch
        %792 = sbr.rel (%p790) target = $region64
      $region63: #{_multi_similarity_loss.1} parent=51 // pred_region
        %s793 = smul.u32 4, %s20
        %p794 = scmp.lt.s32.totalorder %s793, 11
        %s795 = scalar_select %p794, %s793, 11
        %s796 = smul.addr %s795, 8
        %s797 = scalar_lea.vmem %s6, %s796
      $region64: #{_multi_similarity_loss.1} parent=51 // pred_fallthru
        _
    $region52: #{_multi_similarity_loss.1} parent=5 // pred_fallthru
      _
  $region6: #{_multi_similarity_loss.1} parent=0 // loop_footer
    %s18 = sadd.s32 1, %s14
  $region7: #{_multi_similarity_loss.1} parent=0 // loop_footer_branch
    %13 = sbr.rel target = $region3
  $region8: #{_multi_similarity_loss.1} parent=0 // loop_exit
    _

</llo_original>
